<compile_context>
chip_gen: v7x
topology: tpu7x:2x2x1
jax: 0.10.0
libtpu: 0.0.40
codegen_flags: <defaults>
</compile_context>

<pallas_src>
import jax
import jax.numpy as jnp
from jax.experimental import pallas as pl
from jax.experimental.pallas import tpu as pltpu


def mlp_kernel(xT_ref, w1a_ref, b1a_ref, w2a_ref, w3a_ref, oT_ref):
    # Batch tile TB is on the 128-lane axis.
    x_t = xT_ref[...]                                                   # (1, TB) f32

    # Layer 1: Linear(1,32)+ReLU as a VPU broadcast mul (K=1 matmul wastes the MXU).
    # Row 0 of (w1a,b1a) is (0,1), so h1 row 0 == 1.0 exactly -> folded bias column.
    h1 = jnp.maximum(w1a_ref[...] * x_t + b1a_ref[...], 0.0)           # (33, TB) f32
    h1 = h1.astype(w2a_ref.dtype)                                      # bf16 for the MXU

    # Layer 2: Linear(32,64)+ReLU.  Bias folded into the contraction (w2a = [b2 | w2];
    # w2a row 0 regenerates the ones row for layer 3).  bf16 MXU, f32 accumulation.
    h2 = jnp.dot(w2a_ref[...], h1, preferred_element_type=jnp.float32)  # (65, TB) f32
    h2 = jnp.maximum(h2, 0.0).astype(w3a_ref.dtype)

    # Layer 3: Linear(64,1).  w3a = [b3 | w3]; M=1 but N = TB is lane-dense.
    y = jnp.dot(w3a_ref[...], h2, preferred_element_type=jnp.float32)   # (1, TB)
    oT_ref[...] = y.astype(oT_ref.dtype)


def _pick_tb(batch, cap=32768):
    """Largest lane-aligned batch tile <= cap that divides B; prefer >= 2 grid steps
    (v7x megacore).  Ragged B (not a 128 multiple) falls back to a single full block."""
    if batch % 128 != 0:
        return batch  # TODO(synk): pad B to a 128 multiple in the caller if this path is hot.
    tb = (min(cap, batch) // 128) * 128
    while batch % tb != 0:
        tb -= 128
    if batch // tb < 2 and batch % 256 == 0:
        tb = batch // 2          # give the 'parallel' axis >= 2 tiles for v7x's 2 TCs
    return tb


def _augment_params(params, use_bf16=True):
    """Fold biases into the contractions.  Torch layout in: w (out,in), b (out,1), b3 (1,)."""
    f32 = jnp.float32
    mat_dtype = jnp.bfloat16 if use_bf16 else jnp.float32
    w1, b1 = params["w1"].astype(f32), params["b1"].astype(f32)        # (32,1), (32,1)
    w2, b2 = params["w2"].astype(f32), params["b2"].astype(f32)        # (64,32), (64,1)
    w3, b3 = params["w3"].astype(f32), params["b3"].astype(f32)        # (1,64),  (1,)

    # h1 row 0 = relu(0*x + 1) = 1  -> bias column for layer 2.
    w1a = jnp.concatenate([jnp.zeros((1, 1), f32), w1], axis=0)        # (33, 1)
    b1a = jnp.concatenate([jnp.ones((1, 1), f32), b1], axis=0)         # (33, 1)

    # w2a row 0 = [1, 0...0] -> h2 row 0 = relu(1) = 1 (bias column for layer 3).
    ones_row = jnp.concatenate([jnp.ones((1, 1), f32), jnp.zeros((1, 32), f32)], axis=1)
    w2a = jnp.concatenate([ones_row, jnp.concatenate([b2, w2], axis=1)],
                          axis=0).astype(mat_dtype)                    # (65, 33)
    w3a = jnp.concatenate([b3.reshape(1, 1), w3], axis=1).astype(mat_dtype)  # (1, 65)
    return w1a, b1a, w2a, w3a


def basic_dnn_regression(x, params, *, tb=None, use_bf16=True):
    """x: (B, 1) float32.  Returns (B, 1)."""
    B, F = x.shape
    assert F == 1
    if tb is None:
        tb = _pick_tb(B)
    assert B % tb == 0

    w1a, b1a, w2a, w3a = _augment_params(params, use_bf16)

    # Layout plumbing only (contiguous reshape -> bitcast): batch onto the lane axis.
    x_t = x.reshape(1, B)

    def resident(arr):
        # < 5 KiB of weights total: VMEM-resident, constant index_map -> DMA'd once.
        return pl.BlockSpec(arr.shape, lambda i: (0,) * arr.ndim)

    out_t = pl.pallas_call(
        mlp_kernel,
        out_shape=jax.ShapeDtypeStruct((1, B), x.dtype),
        grid_spec=pltpu.PrefetchScalarGridSpec(
            num_scalar_prefetch=0,
            grid=(B // tb,),
            in_specs=[
                pl.BlockSpec((1, tb), lambda i: (0, i)),               # x^T tile, lane-dense
                resident(w1a), resident(b1a), resident(w2a), resident(w3a),
            ],
            out_specs=pl.BlockSpec((1, tb), lambda i: (0, i)),         # y^T tile, lane-dense
        ),
        compiler_params=pltpu.CompilerParams(
            dimension_semantics=("parallel",),    # independent batch tiles: megacore-shardable
            vmem_limit_bytes=32 << 20,            # headroom for TB=32768 bf16 intermediates
        ),
    )(x_t, w1a, b1a, w2a, w3a)

    return out_t.reshape(B, 1)


def init_params(key):
    """Deterministic init mimicking torch.nn.Linear default U[-1/sqrt(fan_in), 1/sqrt(fan_in)]."""
    ks = jax.random.split(key, 6)

    def linear(kw, kb, fan_in, fan_out):
        bound = 1.0 / jnp.sqrt(jnp.float32(fan_in))
        w = jax.random.uniform(kw, (fan_out, fan_in), jnp.float32, -bound, bound)
        b = jax.random.uniform(kb, (fan_out, 1), jnp.float32, -bound, bound)
        return w, b

    w1, b1 = linear(ks[0], ks[1], 1, 32)
    w2, b2 = linear(ks[2], ks[3], 32, 64)
    w3, b3 = linear(ks[4], ks[5], 64, 1)
    return {"w1": w1, "b1": b1, "w2": w2, "b2": b2, "w3": w3, "b3": b3.reshape(1)}


def reference_f32(x, p):
    h1 = jnp.maximum(x @ p["w1"].T + p["b1"].T, 0.0)
    h2 = jnp.maximum(h1 @ p["w2"].T + p["b2"].T, 0.0)
    return h2 @ p["w3"].T + p["b3"]


def reference_matched(x, p):
    """Mirrors the kernel's precision (bf16 MXU operands/intermediates, f32 accumulation)."""
    f32, bf16 = jnp.float32, jnp.bfloat16
    h1 = jnp.maximum(x @ p["w1"].T + p["b1"].T, 0.0).astype(bf16)
    h2 = (jnp.dot(h1, p["w2"].astype(bf16).T, preferred_element_type=f32)
          + p["b2"].astype(bf16).astype(f32).T)
    h2 = jnp.maximum(h2, 0.0).astype(bf16)
    return (jnp.dot(h2, p["w3"].astype(bf16).T, preferred_element_type=f32)
            + p["b3"].astype(bf16).astype(f32))


if __name__ == "__main__":
    key = jax.random.PRNGKey(0)
    k_param, k_x = jax.random.split(key)
    params = init_params(k_param)

    B = 512                                   # lane-dense; _pick_tb -> 2 tiles of 256 lanes
    x = jax.random.normal(k_x, (B, 1), jnp.float32)

    out = jax.block_until_ready(basic_dnn_regression(x, params))
    ref_m = jax.block_until_ready(reference_matched(x, params))
    ref_f = jax.block_until_ready(reference_f32(x, params))

    assert out.shape == (B, 1)
    # Tight check against a precision-matched (bf16-operand) reference.
    assert jnp.allclose(out, ref_m, atol=1e-3, rtol=1e-3), "mismatch vs precision-matched reference"
    # Loose sanity check against the pure-f32 reference (bf16 rounding only).
    assert jnp.allclose(out, ref_f, atol=2.5e-1, rtol=5e-2), "gross mismatch vs f32 reference"
    print("KERNEL_OK")
</pallas_src>

<mosaic_0001>
module attributes {stable_mosaic.version = 11 : i64} {
  func.func @mlp_kernel(%arg0: i32, %arg1: memref<1x256xf32, #tpu.memory_space<vmem>>, %arg2: memref<33x1xf32, #tpu.memory_space<vmem>>, %arg3: memref<33x1xf32, #tpu.memory_space<vmem>>, %arg4: memref<65x33xbf16, #tpu.memory_space<vmem>>, %arg5: memref<1x65xbf16, #tpu.memory_space<vmem>>, %arg6: memref<1x256xf32, #tpu.memory_space<vmem>>) attributes {dimension_semantics = [#tpu.dimension_semantics<parallel>], iteration_bounds = array<i64: 2>, scalar_prefetch = 0 : i64, scratch_operands = 0 : i64, tpu.core_type = #tpu.core_type<tc>, window_params = [{transform_indices = @transform_0, window_bounds = array<i64: 1, 256>}, {pipeline_mode = #tpu.pipeline_mode<synchronous>, transform_indices = @transform_1, window_bounds = array<i64: 33, 1>}, {pipeline_mode = #tpu.pipeline_mode<synchronous>, transform_indices = @transform_2, window_bounds = array<i64: 33, 1>}, {pipeline_mode = #tpu.pipeline_mode<synchronous>, transform_indices = @transform_3, window_bounds = array<i64: 65, 33>}, {pipeline_mode = #tpu.pipeline_mode<synchronous>, transform_indices = @transform_4, window_bounds = array<i64: 1, 65>}, {transform_indices = @transform_5, window_bounds = array<i64: 1, 256>}]} {
    %c0 = arith.constant 0 : index
    %c0_0 = arith.constant 0 : index
    %0 = vector.load %arg1[%c0, %c0_0] : memref<1x256xf32, #tpu.memory_space<vmem>>, vector<1x256xf32>
    %c0_1 = arith.constant 0 : index
    %c0_2 = arith.constant 0 : index
    %1 = vector.load %arg2[%c0_1, %c0_2] : memref<33x1xf32, #tpu.memory_space<vmem>>, vector<33x1xf32>
    %2 = vector.broadcast %1 : vector<33x1xf32> to vector<33x256xf32>
    %3 = vector.broadcast %0 : vector<1x256xf32> to vector<33x256xf32>
    %4 = arith.mulf %2, %3 : vector<33x256xf32>
    %c0_3 = arith.constant 0 : index
    %c0_4 = arith.constant 0 : index
    %5 = vector.load %arg3[%c0_3, %c0_4] : memref<33x1xf32, #tpu.memory_space<vmem>>, vector<33x1xf32>
    %6 = vector.broadcast %5 : vector<33x1xf32> to vector<33x256xf32>
    %7 = arith.addf %4, %6 : vector<33x256xf32>
    %cst = arith.constant 0.000000e+00 : f32
    %8 = vector.broadcast %cst : f32 to vector<33x256xf32>
    %9 = arith.maximumf %7, %8 : vector<33x256xf32>
    %10 = arith.truncf %9 : vector<33x256xf32> to vector<33x256xbf16>
    %c0_5 = arith.constant 0 : index
    %c0_6 = arith.constant 0 : index
    %11 = vector.load %arg4[%c0_5, %c0_6] : memref<65x33xbf16, #tpu.memory_space<vmem>>, vector<65x33xbf16>
    %cst_7 = arith.constant dense<0.000000e+00> : vector<65x256xf32>
    %12 = tpu.matmul %11, %10, %cst_7 {dimension_numbers = #tpu.dot_dimension_numbers<[1], [0], [0], [1], [0, 0, 1, 1], [], []>} : vector<65x33xbf16>, vector<33x256xbf16>, vector<65x256xf32> -> vector<65x256xf32>
    %cst_8 = arith.constant 0.000000e+00 : f32
    %13 = vector.broadcast %cst_8 : f32 to vector<65x256xf32>
    %14 = arith.maximumf %12, %13 : vector<65x256xf32>
    %15 = arith.truncf %14 : vector<65x256xf32> to vector<65x256xbf16>
    %c0_9 = arith.constant 0 : index
    %c0_10 = arith.constant 0 : index
    %16 = vector.load %arg5[%c0_9, %c0_10] : memref<1x65xbf16, #tpu.memory_space<vmem>>, vector<1x65xbf16>
    %cst_11 = arith.constant dense<0.000000e+00> : vector<1x256xf32>
    %17 = tpu.matmul %16, %15, %cst_11 {dimension_numbers = #tpu.dot_dimension_numbers<[1], [0], [0], [1], [0, 0, 1, 1], [], []>} : vector<1x65xbf16>, vector<65x256xbf16>, vector<1x256xf32> -> vector<1x256xf32>
    %c0_12 = arith.constant 0 : index
    %c0_13 = arith.constant 0 : index
    %18 = vector.load %arg6[%c0_12, %c0_13] : memref<1x256xf32, #tpu.memory_space<vmem>>, vector<1x256xf32>
    tpu.vector_store %arg6[%c0_12, %c0_13], %17 {strides = array<i32>} : memref<1x256xf32, #tpu.memory_space<vmem>>, vector<1x256xf32>,
    return
  }
  func.func @transform_0(%arg0: i32) -> (i32, i32) {
    %c0_i32 = arith.constant 0 : i32
    %c0_i32_0 = arith.constant 0 : i32
    return %c0_i32, %arg0 : i32, i32
  }
  func.func @transform_1(%arg0: i32) -> (i32, i32) {
    %c0_i32 = arith.constant 0 : i32
    %c0_i32_0 = arith.constant 0 : i32
    %c0_i32_1 = arith.constant 0 : i32
    return %c0_i32, %c0_i32_0 : i32, i32
  }
  func.func @transform_2(%arg0: i32) -> (i32, i32) {
    %c0_i32 = arith.constant 0 : i32
    %c0_i32_0 = arith.constant 0 : i32
    %c0_i32_1 = arith.constant 0 : i32
    return %c0_i32, %c0_i32_0 : i32, i32
  }
  func.func @transform_3(%arg0: i32) -> (i32, i32) {
    %c0_i32 = arith.constant 0 : i32
    %c0_i32_0 = arith.constant 0 : i32
    %c0_i32_1 = arith.constant 0 : i32
    return %c0_i32, %c0_i32_0 : i32, i32
  }
  func.func @transform_4(%arg0: i32) -> (i32, i32) {
    %c0_i32 = arith.constant 0 : i32
    %c0_i32_0 = arith.constant 0 : i32
    %c0_i32_1 = arith.constant 0 : i32
    return %c0_i32, %c0_i32_0 : i32, i32
  }
  func.func @transform_5(%arg0: i32) -> (i32, i32) {
    %c0_i32 = arith.constant 0 : i32
    %c0_i32_0 = arith.constant 0 : i32
    return %c0_i32, %arg0 : i32, i32
  }
}

</mosaic_0001>

<llo_original>
// kernel: tpu_custom_call.1
$region0: #{tpu_custom_call.1}
  #allocation0 [shape = 'u32[]', space=smem, size = 0x4, offset = 0x4, fixed_abs, tag = 'smem constant byte address 0x4 - core index']
  #allocation1 [shape = 'u32[144,128]{1,0:T(1,128)}', space=vmem, size = 0x12000, scoped, tag = 'internal scratch']
  %s0 = inlined_call_operand.vmem [shape: f32[1,512], index: 0, kind: input, shape index: {}]
  %s1 = inlined_call_operand.vmem [shape: f32[33,1], index: 1, kind: input, shape index: {}]
  %s2 = inlined_call_operand.vmem [shape: f32[33,1], index: 2, kind: input, shape index: {}]
  %s3 = inlined_call_operand.vmem [shape: bf16[65,33], index: 3, kind: input, shape index: {}]
  %s4 = inlined_call_operand.vmem [shape: bf16[1,65], index: 4, kind: input, shape index: {}]
  %s5 = inlined_call_operand.hbm [shape: f32[1,512], index: 5, kind: output, shape index: {}]
  %s6 = sld [smem:[#allocation0]]
  $region53: #{tpu_custom_call.1} parent=0
    _
  %s8 = ssub.s32 1, %s6
  %s9 = scalar_select 0, %s8, %s6
  $region1: #{tpu_custom_call.1} parent=0
    #allocation2 [shape = 'u8[2048]{0}', space=vmem, size = 0x800, scoped, tag = 'output window, operand 0']
    #allocation3 [shape = 's32[2]{0}', space=sflag, size = 0x8, scoped, tag = 'scoped memory for tpu_custom_call.1']
    %10 = vsyncpa [#allocation3], 0
    %s11 = scalar_lea.sflag [#allocation3], 1
    %12 = vsyncpa %s11, 0
    loop: start=0, step=1, limit=4
    $region2: #{tpu_custom_call.1} parent=1 // loop_pre_header
      _
    $region3: #{tpu_custom_call.1} parent=1 // loop_header
      %s14 = sphi 0, %s18
      %p15 = scmp.ge.s32.totalorder %s14, 4
      %s24 = sphi 0, %s26
      %s27 = sphi 0, %s24
      %s28 = sphi 0, %s27
      %s44 = sphi 0, %s28
      %s48 = sphi 0, %s48
      %s50 = sphi 0, %s48
      %s51 = sphi 0, %s50
      %s65 = sphi 0, %s51
      %s69 = sphi 0, %s69
      %s71 = sphi 0, %s69
      %s72 = sphi 0, %s71
      %s86 = sphi 0, %s72
      %s90 = sphi 0, %s90
      %s92 = sphi 0, %s90
      %s93 = sphi 0, %s92
      %s107 = sphi 0, %s93
      %s111 = sphi 0, %s111
      %s113 = sphi 0, %s111
      %s114 = sphi 0, %s113
      %s128 = sphi 0, %s114
      %s134 = sphi 0, %s136
      %s137 = sphi 0, %s134
      %s138 = sphi 0, %s137
      %s154 = sphi 0, %s138
    $region4: #{tpu_custom_call.1} parent=1 // loop_header_branch
      %17 = sbr.rel (%p15) target = $region8
    $region5: #{tpu_custom_call.1} parent=1 // loop_body
      %s19 = ssub.s32 %s14, 1
      %s20 = ssub.s32 %s14, 2
      %s21 = sadd.s32 %s14, 1
      %s22 = ssub.s32 %s14, %s21
      %p23 = scmp.eq.s32.totalorder %s22, 0
      %s25 = sadd.s32 %s24, 1
      %s26 = scalar_select %p23, %s24, %s25
      %p29 = pneg %p23
      %p30 = scmp.eq.s32.totalorder %s14, 1
      %p31 = por %p29, %p30
      %p32 = scmp.ne.s32.totalorder %s24, %s27
      %p33 = scmp.eq.s32.totalorder %s14, 0
      %p34 = por %p32, %p33
      %p35 = scmp.ne.s32.totalorder %s24, %s27
      %p36 = scmp.eq.s32.totalorder %s19, 1
      %p37 = por %p35, %p36
      %p38 = scmp.ne.s32.totalorder %s27, %s28
      %p39 = scmp.eq.s32.totalorder %s19, 0
      %p40 = por %p38, %p39
      %p41 = scmp.ne.s32.totalorder %s27, %s28
      %p42 = scmp.eq.s32.totalorder %s20, 1
      %p43 = por %p41, %p42
      %p45 = scmp.ne.s32.totalorder %s28, %s44
      %p46 = scmp.eq.s32.totalorder %s20, 0
      %p47 = por %p45, %p46
      %s49 = sadd.s32 %s48, 1
      %p52 = scmp.eq.s32.totalorder %s14, 1
      %p53 = scmp.ne.s32.totalorder %s48, %s50
      %p54 = scmp.eq.s32.totalorder %s14, 0
      %p55 = por %p53, %p54
      %p56 = scmp.ne.s32.totalorder %s48, %s50
      %p57 = scmp.eq.s32.totalorder %s19, 1
      %p58 = por %p56, %p57
      %p59 = scmp.ne.s32.totalorder %s50, %s51
      %p60 = scmp.eq.s32.totalorder %s19, 0
      %p61 = por %p59, %p60
      %p62 = scmp.ne.s32.totalorder %s50, %s51
      %p63 = scmp.eq.s32.totalorder %s20, 1
      %p64 = por %p62, %p63
      %p66 = scmp.ne.s32.totalorder %s51, %s65
      %p67 = scmp.eq.s32.totalorder %s20, 0
      %p68 = por %p66, %p67
      %s70 = sadd.s32 %s69, 1
      %p73 = scmp.eq.s32.totalorder %s14, 1
      %p74 = scmp.ne.s32.totalorder %s69, %s71
      %p75 = scmp.eq.s32.totalorder %s14, 0
      %p76 = por %p74, %p75
      %p77 = scmp.ne.s32.totalorder %s69, %s71
      %p78 = scmp.eq.s32.totalorder %s19, 1
      %p79 = por %p77, %p78
      %p80 = scmp.ne.s32.totalorder %s71, %s72
      %p81 = scmp.eq.s32.totalorder %s19, 0
      %p82 = por %p80, %p81
      %p83 = scmp.ne.s32.totalorder %s71, %s72
      %p84 = scmp.eq.s32.totalorder %s20, 1
      %p85 = por %p83, %p84
      %p87 = scmp.ne.s32.totalorder %s72, %s86
      %p88 = scmp.eq.s32.totalorder %s20, 0
      %p89 = por %p87, %p88
      %s91 = sadd.s32 %s90, 1
      %p94 = scmp.eq.s32.totalorder %s14, 1
      %p95 = scmp.ne.s32.totalorder %s90, %s92
      %p96 = scmp.eq.s32.totalorder %s14, 0
      %p97 = por %p95, %p96
      %p98 = scmp.ne.s32.totalorder %s90, %s92
      %p99 = scmp.eq.s32.totalorder %s19, 1
      %p100 = por %p98, %p99
      %p101 = scmp.ne.s32.totalorder %s92, %s93
      %p102 = scmp.eq.s32.totalorder %s19, 0
      %p103 = por %p101, %p102
      %p104 = scmp.ne.s32.totalorder %s92, %s93
      %p105 = scmp.eq.s32.totalorder %s20, 1
      %p106 = por %p104, %p105
      %p108 = scmp.ne.s32.totalorder %s93, %s107
      %p109 = scmp.eq.s32.totalorder %s20, 0
      %p110 = por %p108, %p109
      %s112 = sadd.s32 %s111, 1
      %p115 = scmp.eq.s32.totalorder %s14, 1
      %p116 = scmp.ne.s32.totalorder %s111, %s113
      %p117 = scmp.eq.s32.totalorder %s14, 0
      %p118 = por %p116, %p117
      %p119 = scmp.ne.s32.totalorder %s111, %s113
      %p120 = scmp.eq.s32.totalorder %s19, 1
      %p121 = por %p119, %p120
      %p122 = scmp.ne.s32.totalorder %s113, %s114
      %p123 = scmp.eq.s32.totalorder %s19, 0
      %p124 = por %p122, %p123
      %p125 = scmp.ne.s32.totalorder %s113, %s114
      %p126 = scmp.eq.s32.totalorder %s20, 1
      %p127 = por %p125, %p126
      %p129 = scmp.ne.s32.totalorder %s114, %s128
      %p130 = scmp.eq.s32.totalorder %s20, 0
      %p131 = por %p129, %p130
      %s132 = ssub.s32 %s14, %s21
      %p133 = scmp.eq.s32.totalorder %s132, 0
      %s135 = sadd.s32 %s134, 1
      %s136 = scalar_select %p133, %s134, %s135
      %p139 = pneg %p133
      %p140 = scmp.eq.s32.totalorder %s14, 1
      %p141 = por %p139, %p140
      %p142 = scmp.ne.s32.totalorder %s134, %s137
      %p143 = scmp.eq.s32.totalorder %s14, 0
      %p144 = por %p142, %p143
      %p145 = scmp.ne.s32.totalorder %s134, %s137
      %p146 = scmp.eq.s32.totalorder %s19, 1
      %p147 = por %p145, %p146
      %p148 = scmp.ne.s32.totalorder %s137, %s138
      %p149 = scmp.eq.s32.totalorder %s19, 0
      %p150 = por %p148, %p149
      %p151 = scmp.ne.s32.totalorder %s137, %s138
      %p152 = scmp.eq.s32.totalorder %s20, 1
      %p153 = por %p151, %p152
      %p155 = scmp.ne.s32.totalorder %s138, %s154
      %p156 = scmp.eq.s32.totalorder %s20, 0
      %p157 = por %p155, %p156
      %p158 = scmp.le.s32.totalorder 1, %s14
      %p159 = scmp.lt.s32.totalorder %s14, 3
      %p160 = pnand %p158, %p159
      %p161 = pneg %p160
      // Predicated region
      $region9: #{tpu_custom_call.1} parent=5 // pred_check
        _
      $region10: #{tpu_custom_call.1} parent=5 // pred_check_branch
        %163 = sbr.rel (%p160) target = $region12
      $region11: #{tpu_custom_call.1} parent=5 // pred_region
        %s164 = ssub.s32 %s14, 1
        // Predicated region
        $region13: #{tpu_custom_call.1} parent=11 // pred_check
          %p165 = pneg %p61
        $region14: #{tpu_custom_call.1} parent=11 // pred_check_branch
          %167 = sbr.rel (%p165) target = $region16
        $region15: #{tpu_custom_call.1} parent=11 // pred_region
          _
        $region16: #{tpu_custom_call.1} parent=11 // pred_fallthru
          _
        // Predicated region
        $region17: #{tpu_custom_call.1} parent=11 // pred_check
          %p168 = pneg %p82
        $region18: #{tpu_custom_call.1} parent=11 // pred_check_branch
          %170 = sbr.rel (%p168) target = $region20
        $region19: #{tpu_custom_call.1} parent=11 // pred_region
          _
        $region20: #{tpu_custom_call.1} parent=11 // pred_fallthru
          _
        // Predicated region
        $region21: #{tpu_custom_call.1} parent=11 // pred_check
          %p171 = pneg %p103
        $region22: #{tpu_custom_call.1} parent=11 // pred_check_branch
          %173 = sbr.rel (%p171) target = $region24
        $region23: #{tpu_custom_call.1} parent=11 // pred_region
          _
        $region24: #{tpu_custom_call.1} parent=11 // pred_fallthru
          _
        // Predicated region
        $region25: #{tpu_custom_call.1} parent=11 // pred_check
          %p174 = pneg %p124
        $region26: #{tpu_custom_call.1} parent=11 // pred_check_branch
          %176 = sbr.rel (%p174) target = $region28
        $region27: #{tpu_custom_call.1} parent=11 // pred_region
          _
        $region28: #{tpu_custom_call.1} parent=11 // pred_fallthru
          _
      $region12: #{tpu_custom_call.1} parent=5 // pred_fallthru
        _
      %p177 = scmp.lt.s32.totalorder %s14, 2
      // Predicated region
      $region29: #{tpu_custom_call.1} parent=5 // pred_check
        %p178 = pneg %p177
      $region30: #{tpu_custom_call.1} parent=5 // pred_check_branch
        %180 = sbr.rel (%p178) target = $region32
      $region31: #{tpu_custom_call.1} parent=5 // pred_region
        // Predicated region
        $region33: #{tpu_custom_call.1} parent=31 // pred_check
          %p181 = pneg %p34
        $region34: #{tpu_custom_call.1} parent=31 // pred_check_branch
          %183 = sbr.rel (%p181) target = $region36
        $region35: #{tpu_custom_call.1} parent=31 // pred_region
          %s184 = smul.u32 2, %s14
          %p185 = scmp.lt.s32.totalorder %s184, 3
          %s186 = scalar_select %p185, %s184, 3
          %s187 = scalar_lea.vmem %s0, %s186
          %s188 = smul.u32 2, %s14
        $region36: #{tpu_custom_call.1} parent=31 // pred_fallthru
          _
      $region32: #{tpu_custom_call.1} parent=5 // pred_fallthru
        _
      %p189 = scmp.le.s32.totalorder 1, %s14
      %p190 = scmp.lt.s32.totalorder %s14, 3
      %p191 = pnand %p189, %p190
      %p192 = pneg %p191
      // Predicated region
      $region37: #{tpu_custom_call.1} parent=5 // pred_check
        _
      $region38: #{tpu_custom_call.1} parent=5 // pred_check_branch
        %194 = sbr.rel (%p191) target = $region40
      $region39: #{tpu_custom_call.1} parent=5 // pred_region
        %s195 = ssub.s32 %s14, 1
        %s196 = smul.u32 2, %s19
        %p197 = scmp.lt.s32.totalorder %s196, 3
        %s198 = scalar_select %p197, %s196, 3
        %s199 = scalar_lea.vmem %s0, %s198
        %p200 = pneg %p40
        %p201 = pneg %p37
        %p202 = pneg %p61
        %p203 = pneg %p58
        %p204 = pneg %p82
        %p205 = pneg %p79
        %p206 = pneg %p103
        %p207 = pneg %p100
        %p208 = pneg %p124
        %p209 = pneg %p121
        %p210 = pneg %p150
        %p211 = pneg %p147
        %s212 = sand.u32 %s137, 1
        %s213 = scalar_lea.sflag [#allocation3], %s212
        %s214 = sand.u32 %s137, 1
        %s215 = smul.addr %s214, 2
        %s216 = scalar_lea.vmem [#allocation2], %s215
        %s217 = smul.u32 2, %s19
        %p218 = scmp.lt.s32.totalorder %s217, 3
        %s219 = scalar_select %p218, %s217, 3
        %s220 = scalar_lea.vmem %s0, %s219
        %s221 = smul.u32 2, %s19
        %s222 = smul.u32 2, %s19
        %v224 = vld [vmem:[%s220] sm:$0x3]
        %v225 = vld [vmem:[%s1] sm:$0xff]
        %v226 = vld [vmem:[%s1 + $0x8] sm:$0xff]
        %v227 = vld [vmem:[%s1 + $0x10] sm:$0xff]
        %v228 = vld [vmem:[%s1 + $0x18] sm:$0xff]
        %v229 = vld [vmem:[%s1 + $0x20] sm:$0x1]
        %231 = vset.pattern.permute.xlu0 0
        %232 = vperm.xlu0 %231, %v225
        %v233 = vpop.permute.xlu0 %232
        %236 = vset.pattern.permute.xlu0 0
        %237 = vperm.xlu0 %236, %v226
        %v238 = vpop.permute.xlu0 %237
        %241 = vset.pattern.permute.xlu0 0
        %242 = vperm.xlu0 %241, %v227
        %v243 = vpop.permute.xlu0 %242
        %246 = vset.pattern.permute.xlu0 0
        %247 = vperm.xlu0 %246, %v228
        %v248 = vpop.permute.xlu0 %247
        %251 = vset.pattern.permute.xlu0 0
        %252 = vperm.xlu0 %251, %v229
        %v253 = vpop.permute.xlu0 %252
        %v256 = vlaneseq
        %v257 = vshrl.u32 %v256, 7
        %v258 = vsub.s32 0, %v257
        %v259 = vrot.slane %v224, %v258
        %v260 = vlaneseq
        %v261 = vshrl.u32 %v260, 7
        %v262 = vsub.s32 1, %v261
        %v263 = vrot.slane %v224, %v262
        %v266 = vmul.f32 %v233, %v259
        %v267 = vmul.f32 %v233, %v263
        %v268 = vmul.f32 %v238, %v259
        %v269 = vmul.f32 %v238, %v263
        %v270 = vmul.f32 %v243, %v259
        %v271 = vmul.f32 %v243, %v263
        %v272 = vmul.f32 %v248, %v259
        %v273 = vmul.f32 %v248, %v263
        %v274 = vmul.f32 %v253, %v259
        %v275 = vmul.f32 %v253, %v263
        %v276 = vld [vmem:[%s2] sm:$0xff]
        %v277 = vld [vmem:[%s2 + $0x8] sm:$0xff]
        %v278 = vld [vmem:[%s2 + $0x10] sm:$0xff]
        %v279 = vld [vmem:[%s2 + $0x18] sm:$0xff]
        %v280 = vld [vmem:[%s2 + $0x20] sm:$0x1]
        %282 = vset.pattern.permute.xlu0 0
        %283 = vperm.xlu0 %282, %v276
        %v284 = vpop.permute.xlu0 %283
        %287 = vset.pattern.permute.xlu0 0
        %288 = vperm.xlu0 %287, %v277
        %v289 = vpop.permute.xlu0 %288
        %292 = vset.pattern.permute.xlu0 0
        %293 = vperm.xlu0 %292, %v278
        %v294 = vpop.permute.xlu0 %293
        %297 = vset.pattern.permute.xlu0 0
        %298 = vperm.xlu0 %297, %v279
        %v299 = vpop.permute.xlu0 %298
        %302 = vset.pattern.permute.xlu0 0
        %303 = vperm.xlu0 %302, %v280
        %v304 = vpop.permute.xlu0 %303
        %v306 = vadd.f32 %v266, %v284
        %v307 = vadd.f32 %v267, %v284
        %v308 = vadd.f32 %v268, %v289
        %v309 = vadd.f32 %v269, %v289
        %v310 = vadd.f32 %v270, %v294
        %v311 = vadd.f32 %v271, %v294
        %v312 = vadd.f32 %v272, %v299
        %v313 = vadd.f32 %v273, %v299
        %v314 = vadd.f32 %v274, %v304
        %v315 = vadd.f32 %v275, %v304
        %v316 = vmax.f32 %v306, 0.0
        %v317 = vmax.f32 %v307, 0.0
        %v318 = vmax.f32 %v308, 0.0
        %v319 = vmax.f32 %v309, 0.0
        %v320 = vmax.f32 %v310, 0.0
        %v321 = vmax.f32 %v311, 0.0
        %v322 = vmax.f32 %v312, 0.0
        %v323 = vmax.f32 %v313, 0.0
        %v324 = vmax.f32 %v314, 0.0
        %v325 = vmax.f32 %v315, 0.0
        %v326 = vpack.c.bf16 %v318, %v316
        %v327 = vpack.c.bf16 %v319, %v317
        %v328 = vpack.c.bf16 %v322, %v320
        %v329 = vpack.c.bf16 %v323, %v321
        %v330 = vpack.c.bf16 %v324, %v324
        %v331 = vpack.c.bf16 %v325, %v325
        %v332 = vld [vmem:[%s3] sm:$0xf]
        %v333 = vld [vmem:[%s3 + $0x4] sm:$0xf]
        %v334 = vld [vmem:[%s3 + $0x8] sm:$0xf]
        %v335 = vld [vmem:[%s3 + $0xc] sm:$0xf]
        %v336 = vld [vmem:[%s3 + $0x10] sm:$0xf]
        %v337 = vld [vmem:[%s3 + $0x14] sm:$0xf]
        %v338 = vld [vmem:[%s3 + $0x18] sm:$0xf]
        %v339 = vld [vmem:[%s3 + $0x1c] sm:$0xf]
        %v340 = vld [vmem:[%s3 + $0x20] sm:$0x1]
        %v350 = vunpack.c.l.b16 %v332
        %v351 = vunpack.c.l.b16 %v333
        %v352 = vunpack.c.l.b16 %v334
        %v353 = vunpack.c.l.b16 %v335
        %v354 = vunpack.c.l.b16 %v336
        %v355 = vunpack.c.l.b16 %v337
        %v356 = vunpack.c.l.b16 %v338
        %v357 = vunpack.c.l.b16 %v339
        %v358 = vunpack.c.l.b16 %v340
        %v359 = vpack.c.b16 %v351, %v350
        %v360 = vpack.c.b16 %v353, %v352
        %v361 = vpack.c.b16 %v355, %v354
        %v362 = vpack.c.b16 %v357, %v356
        %v363 = vpack.c.b16 %v358, %v358
        %vm364 = vcmask 269312
        %v366 = vsel %vm364, %v359, 0
        %v369 = vsel %vm364, %v360, 0
        %v372 = vsel %vm364, %v361, 0
        %v375 = vsel %vm364, %v362, 0
        %v378 = vsel %vm364, %v363, 0
        %vm380 = vcmask 1040384
        %v381 = vsel 0, 4294967295, 65535
        %v382 = vsel %vm380, %v381, 0
        %v384 = vand.u32 %v330, %v382
        %v387 = vand.u32 %v331, %v382
        %389 = vmatprep.subr.bf16.mxu0 %v327
        %390 = vmatpush1.bf16.msra.mxu0 %v326
        %391 = vmatprep.subr.bf16.mxu0 %v329
        %392 = vmatpush1.bf16.msra.mxu0 %v328
        %393 = vmatprep.subr.bf16.mxu0 %v387
        %394 = vmatpush1.bf16.msra.mxu0 %v384
        %395 = vmatprep.subr.bf16.mxu0 0
        %396 = vmatpush1.bf16.msra.mxu0 0
        %397 = vmatprep.subr.bf16.mxu0 0
        %398 = vmatpush1.bf16.msra.mxu0 0
        %399 = vmatprep.subr.bf16.mxu0 0
        %400 = vmatpush1.bf16.msra.mxu0 0
        %401 = vmatprep.subr.bf16.mxu0 0
        %402 = vmatpush1.bf16.msra.mxu0 0
        %403 = vmatprep.subr.bf16.mxu0 0
        %404 = vmatpush1.bf16.msra.mxu0 0
        %405 = vmatprep.subr.bf16.mxu0 0
        %406 = vmatpush1.bf16.msra.mxu0 0
        %407 = vmatprep.subr.bf16.mxu0 0
        %408 = vmatpush1.bf16.msra.mxu0 0
        %409 = vmatprep.subr.bf16.mxu0 0
        %410 = vmatpush1.bf16.msra.mxu0 0
        %411 = vmatprep.subr.bf16.mxu0 0
        %412 = vmatpush1.bf16.msra.mxu0 0
        %413 = vmatprep.subr.bf16.mxu0 0
        %414 = vmatpush1.bf16.msra.mxu0 0
        %415 = vmatprep.subr.bf16.mxu0 0
        %416 = vmatpush1.bf16.msra.mxu0 0
        %417 = vmatprep.subr.bf16.mxu0 0
        %418 = vmatpush1.bf16.msra.mxu0 0
        %419 = vmatprep.subr.bf16.mxu0 0
        %420 = vmatpush1.bf16.msra.mxu0 0
        %421 = vmatprep.mubr.bf16.mxu0 0
        %422 = vmatmul.mubr.bf16.gmra.mrb[0].mxu0 %v366
        %v423 = vpop.f32.mrb[0].mxu0
        %v424 = vadd.f32 0.0, %v423
        %v425 = vpop.f32.mrb[0].mxu0
        %v426 = vadd.f32 0.0, %v425
        %v427 = vpop.f32.mrb[0].mxu0
        %v428 = vadd.f32 0.0, %v427
        %v429 = vpop.f32.mrb[0].mxu0
        %v430 = vadd.f32 0.0, %v429
        %431 = vmatprep.mubr.bf16.mxu0 0
        %432 = vmatmul.mubr.bf16.gmra.mrb[0].mxu0 %v369
        %v433 = vpop.f32.mrb[0].mxu0
        %v434 = vadd.f32 0.0, %v433
        %v435 = vpop.f32.mrb[0].mxu0
        %v436 = vadd.f32 0.0, %v435
        %v437 = vpop.f32.mrb[0].mxu0
        %v438 = vadd.f32 0.0, %v437
        %v439 = vpop.f32.mrb[0].mxu0
        %v440 = vadd.f32 0.0, %v439
        %441 = vmatprep.mubr.bf16.mxu0 0
        %442 = vmatmul.mubr.bf16.gmra.mrb[0].mxu0 %v372
        %v443 = vpop.f32.mrb[0].mxu0
        %v444 = vadd.f32 0.0, %v443
        %v445 = vpop.f32.mrb[0].mxu0
        %v446 = vadd.f32 0.0, %v445
        %v447 = vpop.f32.mrb[0].mxu0
        %v448 = vadd.f32 0.0, %v447
        %v449 = vpop.f32.mrb[0].mxu0
        %v450 = vadd.f32 0.0, %v449
        %451 = vmatprep.mubr.bf16.mxu0 0
        %452 = vmatmul.mubr.bf16.gmra.mrb[0].mxu0 %v375
        %v453 = vpop.f32.mrb[0].mxu0
        %v454 = vadd.f32 0.0, %v453
        %v455 = vpop.f32.mrb[0].mxu0
        %v456 = vadd.f32 0.0, %v455
        %v457 = vpop.f32.mrb[0].mxu0
        %v458 = vadd.f32 0.0, %v457
        %v459 = vpop.f32.mrb[0].mxu0
        %v460 = vadd.f32 0.0, %v459
        %461 = vmatprep.mubr.bf16.mxu0 0
        %462 = vmatmul.mubr.bf16.gmra.mrb[0].mxu0 %v378
        %v463 = vpop.f32.mrb[0].mxu0
        %v464 = vadd.f32 0.0, %v463
        %v465 = vpop.f32.mrb[0].mxu0
        %v466 = vadd.f32 0.0, %v465
        %v467 = vpop.f32.mrb[0].mxu0
        %v468 = vpop.f32.mrb[0].mxu0
        %469 = vdwg.mxu0
        %v470 = vmax.f32 %v424, 0.0
        %v471 = vmax.f32 %v426, 0.0
        %v472 = vmax.f32 %v428, 0.0
        %v473 = vmax.f32 %v430, 0.0
        %v474 = vmax.f32 %v434, 0.0
        %v475 = vmax.f32 %v436, 0.0
        %v476 = vmax.f32 %v438, 0.0
        %v477 = vmax.f32 %v440, 0.0
        %v478 = vmax.f32 %v444, 0.0
        %v479 = vmax.f32 %v446, 0.0
        %v480 = vmax.f32 %v448, 0.0
        %v481 = vmax.f32 %v450, 0.0
        %v482 = vmax.f32 %v454, 0.0
        %v483 = vmax.f32 %v456, 0.0
        %v484 = vmax.f32 %v458, 0.0
        %v485 = vmax.f32 %v460, 0.0
        %v486 = vmax.f32 %v464, 0.0
        %v487 = vmax.f32 %v466, 0.0
        %v488 = vpack.c.bf16 %v472, %v470
        %v489 = vpack.c.bf16 %v473, %v471
        %v490 = vpack.c.bf16 %v476, %v474
        %v491 = vpack.c.bf16 %v477, %v475
        %v492 = vpack.c.bf16 %v480, %v478
        %v493 = vpack.c.bf16 %v481, %v479
        %v494 = vpack.c.bf16 %v484, %v482
        %v495 = vpack.c.bf16 %v485, %v483
        %v496 = vpack.c.bf16 %v486, %v486
        %v497 = vpack.c.bf16 %v487, %v487
        %v498 = vld [vmem:[%s4] sm:$0x1]
        %vm499 = vcmask 531456
        %v501 = vsel %vm499, %v498, 0
        %v504 = vand.u32 %v496, %v382
        %v507 = vand.u32 %v497, %v382
        %509 = vmatprep.subr.bf16.mxu0 %v489
        %510 = vmatpush1.bf16.msra.mxu0 %v488
        %511 = vmatprep.subr.bf16.mxu0 %v491
        %512 = vmatpush1.bf16.msra.mxu0 %v490
        %513 = vmatprep.subr.bf16.mxu0 %v493
        %514 = vmatpush1.bf16.msra.mxu0 %v492
        %515 = vmatprep.subr.bf16.mxu0 %v495
        %516 = vmatpush1.bf16.msra.mxu0 %v494
        %517 = vmatprep.subr.bf16.mxu0 %v507
        %518 = vmatpush1.bf16.msra.mxu0 %v504
        %519 = vmatprep.subr.bf16.mxu0 0
        %520 = vmatpush1.bf16.msra.mxu0 0
        %521 = vmatprep.subr.bf16.mxu0 0
        %522 = vmatpush1.bf16.msra.mxu0 0
        %523 = vmatprep.subr.bf16.mxu0 0
        %524 = vmatpush1.bf16.msra.mxu0 0
        %525 = vmatprep.subr.bf16.mxu0 0
        %526 = vmatpush1.bf16.msra.mxu0 0
        %527 = vmatprep.subr.bf16.mxu0 0
        %528 = vmatpush1.bf16.msra.mxu0 0
        %529 = vmatprep.subr.bf16.mxu0 0
        %530 = vmatpush1.bf16.msra.mxu0 0
        %531 = vmatprep.subr.bf16.mxu0 0
        %532 = vmatpush1.bf16.msra.mxu0 0
        %533 = vmatprep.subr.bf16.mxu0 0
        %534 = vmatpush1.bf16.msra.mxu0 0
        %535 = vmatprep.subr.bf16.mxu0 0
        %536 = vmatpush1.bf16.msra.mxu0 0
        %537 = vmatprep.subr.bf16.mxu0 0
        %538 = vmatpush1.bf16.msra.mxu0 0
        %539 = vmatprep.subr.bf16.mxu0 0
        %540 = vmatpush1.bf16.msra.mxu0 0
        %541 = vmatprep.mubr.bf16.mxu0 0
        %542 = vmatmul.mubr.bf16.gmra.mrb[0].mxu0 %v501
        %v543 = vpop.f32.mrb[0].mxu0
        %v544 = vadd.f32 0.0, %v543
        %v545 = vpop.f32.mrb[0].mxu0
        %v546 = vadd.f32 0.0, %v545
        %v547 = vpop.f32.mrb[0].mxu0
        %v548 = vpop.f32.mrb[0].mxu0
        %549 = vdwg.mxu0
        %v552 = vcombine.low %v544, %v546
        %v554 = vunpack.c.l.s4 1966171168
        %v555 = vunpack.c.0.s8 %v554
        %v556 = vlaneseq
        %v557 = vshrl.u32 %v556, 7
        %v558 = vsub.s32 %v555, %v557
        %v559 = vrot.slane %v552, %v558
        %v561 = vunpack.c.l.s4 1966171168
        %v562 = vunpack.c.0.s8 %v561
        %v563 = vlaneseq
        %v564 = vshrl.u32 %v563, 7
        %v565 = vsub.s32 %v562, %v564
        %v566 = vrot.slane %v559, %v565
        %v568 = vlaneseq
        %vm569 = vcmp.ge.s32.totalorder %v568, 0
        %vm570 = vcmp.lt.s32.totalorder %v568, 256
        %vm571 = vmand %vm569, %vm570
        %572 = vst.msk [vmem:[%s216] sm:$0x3] %vm571, %v566
        %s573 = sand.u32 %s137, 1
        %s574 = scalar_lea.sflag [#allocation3], %s573
        %s575 = sand.u32 %s137, 1
        %s576 = smul.addr %s575, 2
        %s577 = scalar_lea.vmem [#allocation2], %s576
        // Predicated region
        $region41: #{tpu_custom_call.1} parent=39 // pred_check
          %p578 = pneg %p147
        $region42: #{tpu_custom_call.1} parent=39 // pred_check_branch
          %580 = sbr.rel (%p578) target = $region44
        $region43: #{tpu_custom_call.1} parent=39 // pred_region
          %s581 = smul.u32 2, %s19
          %s583 = ssub.s32 32, 32
          %584 = vsyncadd %s574, %s583
          %s585 = smul.addr %s581, 16
          %s586 = scalar_lea.hbm %s5, %s585
          %s588 = sshll.u32 %s577, 4
          %s589 = int_to_ptr.vmem [resolvable:$true] %s588
          %591 = dma.vmem_to_hbm [thread:$0]  %s589, 32, %s586, %s574
        $region44: #{tpu_custom_call.1} parent=39 // pred_fallthru
          _
      $region40: #{tpu_custom_call.1} parent=5 // pred_fallthru
        _
      %p592 = scmp.le.s32.totalorder 2, %s14
      // Predicated region
      $region45: #{tpu_custom_call.1} parent=5 // pred_check
        %p593 = pneg %p592
      $region46: #{tpu_custom_call.1} parent=5 // pred_check_branch
        %595 = sbr.rel (%p593) target = $region48
      $region47: #{tpu_custom_call.1} parent=5 // pred_region
        %s596 = ssub.s32 %s14, 2
        // Predicated region
        $region49: #{tpu_custom_call.1} parent=47 // pred_check
          %p597 = pneg %p153
        $region50: #{tpu_custom_call.1} parent=47 // pred_check_branch
          %599 = sbr.rel (%p597) target = $region52
        $region51: #{tpu_custom_call.1} parent=47 // pred_region
          %s600 = sand.u32 %s138, 1
          %s601 = scalar_lea.sflag [#allocation3], %s600
          %s602 = sand.u32 %s138, 1
          %s603 = smul.addr %s602, 2
          %s604 = scalar_lea.vmem [#allocation2], %s603
          %605 = dma.done %s601, 32
        $region52: #{tpu_custom_call.1} parent=47 // pred_fallthru
          _
      $region48: #{tpu_custom_call.1} parent=5 // pred_fallthru
        _
    $region6: #{tpu_custom_call.1} parent=1 // loop_footer
      %s18 = sadd.s32 1, %s14
    $region7: #{tpu_custom_call.1} parent=1 // loop_footer_branch
      %13 = sbr.rel target = $region3
    $region8: #{tpu_custom_call.1} parent=1 // loop_exit
      _
    %606 = vsyncpa [#allocation3], 1
    %s607 = scalar_lea.sflag [#allocation3], 1
    %608 = vsyncpa %s607, 1

</llo_original>
